<compile_context>
chip_gen: v6e
topology: v6e:2x2x1
jax: 0.10.0
libtpu: 0.0.40
codegen_flags: <defaults>
</compile_context>

<pallas_src>
import functools

import jax
import jax.numpy as jnp
from jax.experimental import pallas as pl
from jax.experimental.pallas import tpu as pltpu

_EPS = 1e-5


def _ln_kernel(*refs, bias_free):
    """Block shapes (after squeeze): x/o -> (C, TP); weight/bias -> (C, 1)."""
    if bias_free:
        x_ref, w_ref, o_ref = refs
        b_ref = None
    else:
        x_ref, w_ref, b_ref, o_ref = refs

    x = x_ref[...].astype(jnp.float32)                       # (C, TP) f32 working copy
    # Two-pass biased variance over channels (axis=0), f32 accumulation.
    mean = jnp.mean(x, axis=0, keepdims=True)                # (1, TP)
    xc = x - mean
    var = jnp.mean(xc * xc, axis=0, keepdims=True)           # (1, TP)
    scale = jax.lax.rsqrt(var + _EPS) * w_ref[...].astype(jnp.float32)  # (C, TP)
    if bias_free:
        # PyTorch BiasFree: variance uses the mean, normalization does NOT.
        o_ref[...] = (x * scale).astype(o_ref.dtype)
    else:
        o_ref[...] = (xc * scale + b_ref[...].astype(jnp.float32)).astype(o_ref.dtype)


def _pick_spatial_tile(P, C, *, batch,
                       max_lanes=2048,
                       min_lanes=512,
                       target_steps=8,
                       per_buffer_bytes=4 * 1024 * 1024):
    """Spatial (lane) tile: full P if small, else a multiple of 128 in the
    512-2048-lane class, capped by a per-buffer VMEM budget (measured against
    the f32 working copy) and shrunk until the grid has >= target_steps steps
    (for v7x megacore sharding + input/compute/writeback pipelining)."""
    if P <= min_lanes:
        return P                                   # full extent: always a legal block dim
    budget_tp = max(per_buffer_bytes // max(C * 4, 1), 128)
    tp = min(P, max_lanes, budget_tp)
    tp = max((tp // 128) * 128, 128)
    while tp > min_lanes and batch * pl.cdiv(P, tp) < target_steps:
        tp -= 128
    return max(tp, 128)


def layer_norm(x, weight, bias=None, *,
               per_buffer_bytes=4 * 1024 * 1024,
               vmem_limit_bytes=None):
    """Pallas equivalent of the PyTorch `LayerNorm` module forward.

    x: (B, C, H, W) array; weight: (C,); bias: (C,) or None (=> BiasFree).
    Returns an array of the same shape/dtype as x.
    """
    B, C, H, W = x.shape
    assert weight.shape == (C,)
    bias_free = bias is None
    if not bias_free:
        assert bias.shape == (C,)

    P = H * W
    x3 = x.reshape(B, C, P)                 # pure reshape, no data movement
    w3 = weight.reshape(1, C, 1)

    itemsize = jnp.dtype(x.dtype).itemsize
    TP = _pick_spatial_tile(P, C, batch=B, per_buffer_bytes=per_buffer_bytes)
    grid = (B, pl.cdiv(P, TP))              # partial trailing spatial block masked on write

    if vmem_limit_bytes is None:
        # 2x double-buffered input + 2x double-buffered output (x dtype)
        # + ~3 f32-block temporaries (x, xc, fused output path) + params + margin.
        block_bytes = C * TP * itemsize
        f32_bytes = C * TP * 4
        est = 4 * block_bytes + 3 * f32_bytes + 8 * C * 4 + (2 << 20)
        vmem_limit_bytes = int(min(max(est, 16 << 20), 48 << 20))   # <= 48 MiB (v7x-safe)

    x_spec = pl.BlockSpec((pl.Squeezed(), C, TP), lambda b, p: (b, 0, p))
    p_spec = pl.BlockSpec((pl.Squeezed(), C, 1), lambda b, p: (0, 0, 0))  # params: DMA'd once

    if bias_free:
        inputs = (x3, w3)
        in_specs = [x_spec, p_spec]
    else:
        inputs = (x3, w3, bias.reshape(1, C, 1))
        in_specs = [x_spec, p_spec, p_spec]

    out = pl.pallas_call(
        functools.partial(_ln_kernel, bias_free=bias_free),
        out_shape=jax.ShapeDtypeStruct((B, C, P), x.dtype),
        grid_spec=pltpu.PrefetchScalarGridSpec(
            num_scalar_prefetch=0,
            grid=grid,
            in_specs=in_specs,
            out_specs=x_spec,
        ),
        compiler_params=pltpu.CompilerParams(
            dimension_semantics=("parallel", "parallel"),
            vmem_limit_bytes=vmem_limit_bytes,
        ),
    )(*inputs)
    return out.reshape(B, C, H, W)


def _ref_forward(x4, w, b, bias_free):
    """Pure-JAX reference implementing the exact PyTorch math (to_3d layout)."""
    bb, cc, hh, ww = x4.shape
    x3 = x4.transpose(0, 2, 3, 1).reshape(bb, hh * ww, cc)     # to_3d
    mu = jnp.mean(x3, axis=-1, keepdims=True)
    sigma = jnp.var(x3, axis=-1, keepdims=True)                # biased (unbiased=False)
    if bias_free:
        y3 = x3 / jnp.sqrt(sigma + _EPS) * w
    else:
        y3 = (x3 - mu) / jnp.sqrt(sigma + _EPS) * w + b
    return y3.reshape(bb, hh, ww, cc).transpose(0, 3, 1, 2)    # to_4d


if __name__ == "__main__":
    key = jax.random.PRNGKey(0)
    kx, kw, kb = jax.random.split(key, 3)

    B, C, H, W = 2, 32, 16, 16            # dim = normalized_shape = 32
    x = jax.random.normal(kx, (B, C, H, W), dtype=jnp.float32)
    # Deterministic non-trivial params (module init would be ones / zeros).
    weight = 1.0 + 0.1 * jax.random.normal(kw, (C,), dtype=jnp.float32)
    bias = 0.1 * jax.random.normal(kb, (C,), dtype=jnp.float32)

    # BiasFree variant (LayerNorm_type='BiasFree')
    out_bf = jax.block_until_ready(layer_norm(x, weight))
    # WithBias variant (LayerNorm_type='WithBias')
    out_wb = jax.block_until_ready(layer_norm(x, weight, bias))

    assert out_bf.shape == x.shape and out_wb.shape == x.shape
    assert jnp.allclose(out_bf, _ref_forward(x, weight, bias, True),
                        atol=1e-5, rtol=1e-5)
    assert jnp.allclose(out_wb, _ref_forward(x, weight, bias, False),
                        atol=1e-5, rtol=1e-5)

    print("KERNEL_OK")
</pallas_src>

<mosaic_0001>
module attributes {stable_mosaic.version = 11 : i64} {
  func.func @_ln_kernel(%arg0: i32, %arg1: i32, %arg2: memref<1x32x256xf32, #tpu.memory_space<vmem>>, %arg3: memref<1x32x1xf32, #tpu.memory_space<vmem>>, %arg4: memref<1x32x256xf32, #tpu.memory_space<vmem>>) attributes {dimension_semantics = [#tpu.dimension_semantics<parallel>, #tpu.dimension_semantics<parallel>], iteration_bounds = array<i64: 2, 1>, scalar_prefetch = 0 : i64, scratch_operands = 0 : i64, tpu.core_type = #tpu.core_type<tc>, window_params = [{transform_indices = @transform_0, window_bounds = array<i64: 1, 32, 256>}, {pipeline_mode = #tpu.pipeline_mode<synchronous>, transform_indices = @transform_1, window_bounds = array<i64: 1, 32, 1>}, {transform_indices = @transform_2, window_bounds = array<i64: 1, 32, 256>}]} {
    %c0 = arith.constant 0 : index
    %c0_0 = arith.constant 0 : index
    %c0_1 = arith.constant 0 : index
    %0 = vector.load %arg2[%c0, %c0_0, %c0_1] : memref<1x32x256xf32, #tpu.memory_space<vmem>>, vector<1x32x256xf32>
    %1 = vector.shape_cast %0 : vector<1x32x256xf32> to vector<32x256xf32>
    %cst = arith.constant dense<0.000000e+00> : vector<256xf32>
    %2 = vector.multi_reduction <add>, %1, %cst [0] : vector<32x256xf32> to vector<256xf32>
    %3 = vector.shape_cast %2 : vector<256xf32> to vector<1x256xf32>
    %cst_2 = arith.constant 3.200000e+01 : f32
    %4 = vector.broadcast %cst_2 : f32 to vector<1x256xf32>
    %5 = arith.divf %3, %4 : vector<1x256xf32>
    %6 = vector.broadcast %5 : vector<1x256xf32> to vector<32x256xf32>
    %7 = arith.subf %1, %6 : vector<32x256xf32>
    %8 = arith.mulf %7, %7 : vector<32x256xf32>
    %cst_3 = arith.constant dense<0.000000e+00> : vector<256xf32>
    %9 = vector.multi_reduction <add>, %8, %cst_3 [0] : vector<32x256xf32> to vector<256xf32>
    %10 = vector.shape_cast %9 : vector<256xf32> to vector<1x256xf32>
    %cst_4 = arith.constant 3.200000e+01 : f32
    %11 = vector.broadcast %cst_4 : f32 to vector<1x256xf32>
    %12 = arith.divf %10, %11 : vector<1x256xf32>
    %cst_5 = arith.constant 9.99999974E-6 : f32
    %13 = vector.broadcast %cst_5 : f32 to vector<1x256xf32>
    %14 = arith.addf %12, %13 : vector<1x256xf32>
    %15 = math.rsqrt %14 : vector<1x256xf32>
    %c0_6 = arith.constant 0 : index
    %c0_7 = arith.constant 0 : index
    %c0_8 = arith.constant 0 : index
    %16 = vector.load %arg3[%c0_6, %c0_7, %c0_8] : memref<1x32x1xf32, #tpu.memory_space<vmem>>, vector<1x32x1xf32>
    %17 = vector.shape_cast %16 : vector<1x32x1xf32> to vector<32x1xf32>
    %18 = vector.broadcast %15 : vector<1x256xf32> to vector<32x256xf32>
    %19 = vector.broadcast %17 : vector<32x1xf32> to vector<32x256xf32>
    %20 = arith.mulf %18, %19 : vector<32x256xf32>
    %21 = arith.mulf %1, %20 : vector<32x256xf32>
    %c0_9 = arith.constant 0 : index
    %c0_10 = arith.constant 0 : index
    %c0_11 = arith.constant 0 : index
    %22 = vector.load %arg4[%c0_9, %c0_10, %c0_11] : memref<1x32x256xf32, #tpu.memory_space<vmem>>, vector<1x32x256xf32>
    %23 = vector.shape_cast %22 : vector<1x32x256xf32> to vector<32x256xf32>
    %24 = vector.shape_cast %21 : vector<32x256xf32> to vector<1x32x256xf32>
    tpu.vector_store %arg4[%c0_9, %c0_10, %c0_11], %24 {strides = array<i32>} : memref<1x32x256xf32, #tpu.memory_space<vmem>>, vector<1x32x256xf32>,
    return
  }
  func.func @transform_0(%arg0: i32, %arg1: i32) -> (i32, i32, i32) {
    %c0_i32 = arith.constant 0 : i32
    %c0_i32_0 = arith.constant 0 : i32
    return %arg0, %c0_i32, %arg1 : i32, i32, i32
  }
  func.func @transform_1(%arg0: i32, %arg1: i32) -> (i32, i32, i32) {
    %c0_i32 = arith.constant 0 : i32
    %c0_i32_0 = arith.constant 0 : i32
    %c0_i32_1 = arith.constant 0 : i32
    %c0_i32_2 = arith.constant 0 : i32
    return %c0_i32, %c0_i32_0, %c0_i32_1 : i32, i32, i32
  }
  func.func @transform_2(%arg0: i32, %arg1: i32) -> (i32, i32, i32) {
    %c0_i32 = arith.constant 0 : i32
    %c0_i32_0 = arith.constant 0 : i32
    return %arg0, %c0_i32, %arg1 : i32, i32, i32
  }
}

</mosaic_0001>

<llo_original>
// kernel: tpu_custom_call.1
$region0: #{tpu_custom_call.1}
  #allocation0 [shape = 'u32[]', space=smem, size = 0x4, offset = 0x4, fixed_abs, tag = 'smem constant byte address 0x4 - core index']
  #allocation1 [shape = 'u32[144,128]{1,0:T(1,128)}', space=vmem, size = 0x12000, scoped, tag = 'internal scratch']
  %s0 = inlined_call_operand.hbm [shape: f32[2,32,256], index: 0, kind: input, shape index: {}]
  %s1 = inlined_call_operand.vmem [shape: f32[1,32,1], index: 1, kind: input, shape index: {}]
  %s2 = inlined_call_operand.hbm [shape: f32[2,32,256], index: 2, kind: output, shape index: {}]
  %s3 = sld [smem:[#allocation0]]
  $region45: #{tpu_custom_call.1} parent=0
    _
  %s5 = ssub.s32 1, %s3
  %s6 = scalar_select 0, %s5, %s3
  $region1: #{tpu_custom_call.1} parent=0
    #allocation2 [shape = 'u8[65536]{0}', space=vmem, size = 0x10000, scoped, tag = 'input window, operand 0']
    #allocation3 [shape = 's32[2]{0}', space=sflag, size = 0x8, scoped, tag = 'scoped memory for tpu_custom_call.1']
    #allocation4 [shape = 's32[2]{0}', space=sflag, size = 0x8, scoped, tag = 'scoped memory for tpu_custom_call.1']
    #allocation5 [shape = 'u8[65536]{0}', space=vmem, size = 0x10000, scoped, tag = 'output window, operand 0']
    %7 = vsyncpa [#allocation3], 0
    %s8 = scalar_lea.sflag [#allocation3], 1
    %9 = vsyncpa %s8, 0
    %10 = vsyncpa [#allocation4], 0
    %s11 = scalar_lea.sflag [#allocation4], 1
    %12 = vsyncpa %s11, 0
    loop: start=0, step=1, limit=4
    $region2: #{tpu_custom_call.1} parent=1 // loop_pre_header
      _
    $region3: #{tpu_custom_call.1} parent=1 // loop_header
      %s14 = sphi 0, %s18
      %p15 = scmp.ge.s32.totalorder %s14, 4
      %s21 = sphi 0, %s33
      %s22 = sphi 0, %s29
      %s23 = sphi 0, %s21
      %s24 = sphi 0, %s22
      %s25 = sphi 0, %s23
      %s26 = sphi 0, %s24
      %s38 = sphi 0, %s40
      %s41 = sphi 0, %s38
      %s42 = sphi 0, %s41
      %s58 = sphi 0, %s42
      %s62 = sphi 0, %s62
      %s64 = sphi 0, %s62
      %s65 = sphi 0, %s64
      %s79 = sphi 0, %s65
      %s87 = sphi 0, %s89
      %s90 = sphi 0, %s87
      %s91 = sphi 0, %s90
      %s107 = sphi 0, %s91
    $region4: #{tpu_custom_call.1} parent=1 // loop_header_branch
      %17 = sbr.rel (%p15) target = $region8
    $region5: #{tpu_custom_call.1} parent=1 // loop_body
      %s19 = ssub.s32 %s14, 1
      %s20 = ssub.s32 %s14, 2
      %s27 = sadd.s32 1, %s22
      %p28 = scmp.ge.s32.totalorder %s27, 1
      %s29 = scalar_select %p28, 0, %s27
      %s30 = sadd.s32 1, %s21
      %s31 = scalar_select %p28, %s30, %s21
      %p32 = scmp.ge.s32.totalorder %s31, 2
      %s33 = scalar_select %p32, 0, %s31
      %s34 = ssub.s32 %s21, %s33
      %s35 = ssub.s32 %s22, %s29
      %s36 = sor.u32 %s34, %s35
      %p37 = scmp.eq.s32.totalorder %s36, 0
      %s39 = sadd.s32 %s38, 1
      %s40 = scalar_select %p37, %s38, %s39
      %p43 = pneg %p37
      %p44 = scmp.eq.s32.totalorder %s14, 1
      %p45 = por %p43, %p44
      %p46 = scmp.ne.s32.totalorder %s38, %s41
      %p47 = scmp.eq.s32.totalorder %s14, 0
      %p48 = por %p46, %p47
      %p49 = scmp.ne.s32.totalorder %s38, %s41
      %p50 = scmp.eq.s32.totalorder %s19, 1
      %p51 = por %p49, %p50
      %p52 = scmp.ne.s32.totalorder %s41, %s42
      %p53 = scmp.eq.s32.totalorder %s19, 0
      %p54 = por %p52, %p53
      %p55 = scmp.ne.s32.totalorder %s41, %s42
      %p56 = scmp.eq.s32.totalorder %s20, 1
      %p57 = por %p55, %p56
      %p59 = scmp.ne.s32.totalorder %s42, %s58
      %p60 = scmp.eq.s32.totalorder %s20, 0
      %p61 = por %p59, %p60
      %s63 = sadd.s32 %s62, 1
      %p66 = scmp.eq.s32.totalorder %s14, 1
      %p67 = scmp.ne.s32.totalorder %s62, %s64
      %p68 = scmp.eq.s32.totalorder %s14, 0
      %p69 = por %p67, %p68
      %p70 = scmp.ne.s32.totalorder %s62, %s64
      %p71 = scmp.eq.s32.totalorder %s19, 1
      %p72 = por %p70, %p71
      %p73 = scmp.ne.s32.totalorder %s64, %s65
      %p74 = scmp.eq.s32.totalorder %s19, 0
      %p75 = por %p73, %p74
      %p76 = scmp.ne.s32.totalorder %s64, %s65
      %p77 = scmp.eq.s32.totalorder %s20, 1
      %p78 = por %p76, %p77
      %p80 = scmp.ne.s32.totalorder %s65, %s79
      %p81 = scmp.eq.s32.totalorder %s20, 0
      %p82 = por %p80, %p81
      %s83 = ssub.s32 %s21, %s33
      %s84 = ssub.s32 %s22, %s29
      %s85 = sor.u32 %s83, %s84
      %p86 = scmp.eq.s32.totalorder %s85, 0
      %s88 = sadd.s32 %s87, 1
      %s89 = scalar_select %p86, %s87, %s88
      %p92 = pneg %p86
      %p93 = scmp.eq.s32.totalorder %s14, 1
      %p94 = por %p92, %p93
      %p95 = scmp.ne.s32.totalorder %s87, %s90
      %p96 = scmp.eq.s32.totalorder %s14, 0
      %p97 = por %p95, %p96
      %p98 = scmp.ne.s32.totalorder %s87, %s90
      %p99 = scmp.eq.s32.totalorder %s19, 1
      %p100 = por %p98, %p99
      %p101 = scmp.ne.s32.totalorder %s90, %s91
      %p102 = scmp.eq.s32.totalorder %s19, 0
      %p103 = por %p101, %p102
      %p104 = scmp.ne.s32.totalorder %s90, %s91
      %p105 = scmp.eq.s32.totalorder %s20, 1
      %p106 = por %p104, %p105
      %p108 = scmp.ne.s32.totalorder %s91, %s107
      %p109 = scmp.eq.s32.totalorder %s20, 0
      %p110 = por %p108, %p109
      %p111 = scmp.le.s32.totalorder 1, %s14
      %p112 = scmp.lt.s32.totalorder %s14, 3
      %p113 = pnand %p111, %p112
      %p114 = pneg %p113
      // Predicated region
      $region9: #{tpu_custom_call.1} parent=5 // pred_check
        _
      $region10: #{tpu_custom_call.1} parent=5 // pred_check_branch
        %116 = sbr.rel (%p113) target = $region12
      $region11: #{tpu_custom_call.1} parent=5 // pred_region
        %s117 = ssub.s32 %s14, 1
        // Predicated region
        $region13: #{tpu_custom_call.1} parent=11 // pred_check
          %p118 = pneg %p75
        $region14: #{tpu_custom_call.1} parent=11 // pred_check_branch
          %120 = sbr.rel (%p118) target = $region16
        $region15: #{tpu_custom_call.1} parent=11 // pred_region
          _
        $region16: #{tpu_custom_call.1} parent=11 // pred_fallthru
          _
      $region12: #{tpu_custom_call.1} parent=5 // pred_fallthru
        _
      %p121 = scmp.lt.s32.totalorder %s14, 2
      // Predicated region
      $region17: #{tpu_custom_call.1} parent=5 // pred_check
        %p122 = pneg %p121
      $region18: #{tpu_custom_call.1} parent=5 // pred_check_branch
        %124 = sbr.rel (%p122) target = $region20
      $region19: #{tpu_custom_call.1} parent=5 // pred_region
        // Predicated region
        $region21: #{tpu_custom_call.1} parent=19 // pred_check
          %p125 = pneg %p48
        $region22: #{tpu_custom_call.1} parent=19 // pred_check_branch
          %127 = sbr.rel (%p125) target = $region24
        $region23: #{tpu_custom_call.1} parent=19 // pred_region
          %s128 = sand.u32 %s38, 1
          %s129 = scalar_lea.sflag [#allocation3], %s128
          %s130 = sand.u32 %s38, 1
          %s131 = smul.addr %s130, 64
          %s132 = scalar_lea.vmem [#allocation2], %s131
          %s133 = smul.u32 2, %s22
          %s135 = ssub.s32 1024, 1024
          %136 = vsyncadd %s129, %s135
          %s137 = smul.addr %s21, 8
          %s138 = sadd.s32 %s133, %s137
          %s139 = smul.addr %s138, 128
          %s140 = scalar_lea.hbm %s0, %s139
          %s141 = sshll.u32 %s132, 4
          %s142 = int_to_ptr.vmem [resolvable:$true] %s141
          %147 = dma.hbm_to_vmem [thread:$0]  %s140, 1024, %s142, %s129, 256, 256, 16
        $region24: #{tpu_custom_call.1} parent=19 // pred_fallthru
          _
      $region20: #{tpu_custom_call.1} parent=5 // pred_fallthru
        _
      %p148 = scmp.le.s32.totalorder 1, %s14
      %p149 = scmp.lt.s32.totalorder %s14, 3
      %p150 = pnand %p148, %p149
      %p151 = pneg %p150
      // Predicated region
      $region25: #{tpu_custom_call.1} parent=5 // pred_check
        _
      $region26: #{tpu_custom_call.1} parent=5 // pred_check_branch
        %153 = sbr.rel (%p150) target = $region28
      $region27: #{tpu_custom_call.1} parent=5 // pred_region
        %s154 = ssub.s32 %s14, 1
        %s155 = sand.u32 %s41, 1
        %s156 = scalar_lea.sflag [#allocation3], %s155
        %s157 = sand.u32 %s41, 1
        %s158 = smul.addr %s157, 64
        %s159 = scalar_lea.vmem [#allocation2], %s158
        // Predicated region
        $region29: #{tpu_custom_call.1} parent=27 // pred_check
          %p160 = pneg %p54
        $region30: #{tpu_custom_call.1} parent=27 // pred_check_branch
          %162 = sbr.rel (%p160) target = $region32
        $region31: #{tpu_custom_call.1} parent=27 // pred_region
          %163 = dma.done %s156, 1024
        $region32: #{tpu_custom_call.1} parent=27 // pred_fallthru
          _
        %s164 = sand.u32 %s41, 1
        %s165 = scalar_lea.sflag [#allocation3], %s164
        %s166 = sand.u32 %s41, 1
        %s167 = smul.addr %s166, 64
        %s168 = scalar_lea.vmem [#allocation2], %s167
        %p169 = pneg %p54
        %p170 = pneg %p51
        %p171 = pneg %p75
        %p172 = pneg %p72
        %p173 = pneg %p103
        %p174 = pneg %p100
        %s175 = sand.u32 %s90, 1
        %s176 = scalar_lea.sflag [#allocation4], %s175
        %s177 = sand.u32 %s90, 1
        %s178 = smul.addr %s177, 64
        %s179 = scalar_lea.vmem [#allocation5], %s178
        %s180 = smul.u32 2, %s24
        %s181 = smul.u32 2, %s24
        %v182 = vld [vmem:[%s159] sm:$0xff]
        %v183 = vld [vmem:[%s159 + $0x8] sm:$0xff]
        %v184 = vld [vmem:[%s159 + $0x10] sm:$0xff]
        %v185 = vld [vmem:[%s159 + $0x18] sm:$0xff]
        %v186 = vld [vmem:[%s159 + $0x20] sm:$0xff]
        %v187 = vld [vmem:[%s159 + $0x28] sm:$0xff]
        %v188 = vld [vmem:[%s159 + $0x30] sm:$0xff]
        %v189 = vld [vmem:[%s159 + $0x38] sm:$0xff]
        %v190 = vadd.f32 %v182, %v184
        %v191 = vadd.f32 %v190, %v186
        %v192 = vadd.f32 %v191, %v188
        %v193 = vrot.slane %v192, 4
        %v194 = vadd.f32 %v192, %v193
        %v195 = vrot.slane %v194, 2
        %v196 = vadd.f32 %v194, %v195
        %v197 = vrot.slane %v196, 1
        %v198 = vadd.f32 %v196, %v197
        %v199 = vadd.f32 %v183, %v185
        %v200 = vadd.f32 %v199, %v187
        %v201 = vadd.f32 %v200, %v189
        %v202 = vrot.slane %v201, 4
        %v203 = vadd.f32 %v201, %v202
        %v204 = vrot.slane %v203, 2
        %v205 = vadd.f32 %v203, %v204
        %v206 = vrot.slane %v205, 1
        %v207 = vadd.f32 %v205, %v206
        %v208 = vrcp.pop 32.0
        %v209 = vmul.f32 %v198, %v208
        %v210 = vmul.f32 %v207, %v208
        %v211 = vsub.f32 %v182, %v209
        %v212 = vsub.f32 %v183, %v210
        %v213 = vsub.f32 %v184, %v209
        %v214 = vsub.f32 %v185, %v210
        %v215 = vsub.f32 %v186, %v209
        %v216 = vsub.f32 %v187, %v210
        %v217 = vsub.f32 %v188, %v209
        %v218 = vsub.f32 %v189, %v210
        %v219 = vmul.f32 %v211, %v211
        %v220 = vmul.f32 %v212, %v212
        %v221 = vmul.f32 %v213, %v213
        %v222 = vmul.f32 %v214, %v214
        %v223 = vmul.f32 %v215, %v215
        %v224 = vmul.f32 %v216, %v216
        %v225 = vmul.f32 %v217, %v217
        %v226 = vmul.f32 %v218, %v218
        %v227 = vadd.f32 %v219, %v221
        %v228 = vadd.f32 %v227, %v223
        %v229 = vadd.f32 %v228, %v225
        %v230 = vrot.slane %v229, 4
        %v231 = vadd.f32 %v229, %v230
        %v232 = vrot.slane %v231, 2
        %v233 = vadd.f32 %v231, %v232
        %v234 = vrot.slane %v233, 1
        %v235 = vadd.f32 %v233, %v234
        %v236 = vadd.f32 %v220, %v222
        %v237 = vadd.f32 %v236, %v224
        %v238 = vadd.f32 %v237, %v226
        %v239 = vrot.slane %v238, 4
        %v240 = vadd.f32 %v238, %v239
        %v241 = vrot.slane %v240, 2
        %v242 = vadd.f32 %v240, %v241
        %v243 = vrot.slane %v242, 1
        %v244 = vadd.f32 %v242, %v243
        %v245 = vmul.f32 %v235, %v208
        %v246 = vmul.f32 %v244, %v208
        %v247 = vadd.f32 %v245, 1e-05
        %v248 = vadd.f32 %v246, 1e-05
        %v249 = vrsqrt.pop %v247
        %v250 = vrsqrt.pop %v248
        %v251 = vld [vmem:[%s1] sm:$0xff]
        %v252 = vld [vmem:[%s1 + $0x8] sm:$0xff]
        %v253 = vld [vmem:[%s1 + $0x10] sm:$0xff]
        %v254 = vld [vmem:[%s1 + $0x18] sm:$0xff]
        %256 = vset.pattern.permute.xlu0 0
        %257 = vperm.xlu0 %256, %v251
        %v258 = vpop.permute.xlu0 %257
        %261 = vset.pattern.permute.xlu0 0
        %262 = vperm.xlu0 %261, %v252
        %v263 = vpop.permute.xlu0 %262
        %266 = vset.pattern.permute.xlu0 0
        %267 = vperm.xlu0 %266, %v253
        %v268 = vpop.permute.xlu0 %267
        %271 = vset.pattern.permute.xlu0 0
        %272 = vperm.xlu0 %271, %v254
        %v273 = vpop.permute.xlu0 %272
        %v275 = vmul.f32 %v249, %v258
        %v276 = vmul.f32 %v250, %v258
        %v277 = vmul.f32 %v249, %v263
        %v278 = vmul.f32 %v250, %v263
        %v279 = vmul.f32 %v249, %v268
        %v280 = vmul.f32 %v250, %v268
        %v281 = vmul.f32 %v249, %v273
        %v282 = vmul.f32 %v250, %v273
        %v283 = vmul.f32 %v182, %v275
        %v284 = vmul.f32 %v183, %v276
        %v285 = vmul.f32 %v184, %v277
        %v286 = vmul.f32 %v185, %v278
        %v287 = vmul.f32 %v186, %v279
        %v288 = vmul.f32 %v187, %v280
        %v289 = vmul.f32 %v188, %v281
        %v290 = vmul.f32 %v189, %v282
        %291 = vst [vmem:[%s179] sm:$0xff] %v283
        %292 = vst [vmem:[%s179 + $0x8] sm:$0xff] %v284
        %293 = vst [vmem:[%s179 + $0x10] sm:$0xff] %v285
        %294 = vst [vmem:[%s179 + $0x18] sm:$0xff] %v286
        %295 = vst [vmem:[%s179 + $0x20] sm:$0xff] %v287
        %296 = vst [vmem:[%s179 + $0x28] sm:$0xff] %v288
        %297 = vst [vmem:[%s179 + $0x30] sm:$0xff] %v289
        %298 = vst [vmem:[%s179 + $0x38] sm:$0xff] %v290
        %s299 = sand.u32 %s90, 1
        %s300 = scalar_lea.sflag [#allocation4], %s299
        %s301 = sand.u32 %s90, 1
        %s302 = smul.addr %s301, 64
        %s303 = scalar_lea.vmem [#allocation5], %s302
        // Predicated region
        $region33: #{tpu_custom_call.1} parent=27 // pred_check
          %p304 = pneg %p100
        $region34: #{tpu_custom_call.1} parent=27 // pred_check_branch
          %306 = sbr.rel (%p304) target = $region36
        $region35: #{tpu_custom_call.1} parent=27 // pred_region
          %s307 = smul.u32 2, %s24
          %s309 = ssub.s32 1024, 1024
          %310 = vsyncadd %s300, %s309
          %s311 = smul.addr %s23, 8
          %s312 = sadd.s32 %s307, %s311
          %s313 = smul.addr %s312, 128
          %s314 = scalar_lea.hbm %s2, %s313
          %s315 = sshll.u32 %s303, 4
          %s316 = int_to_ptr.vmem [resolvable:$true] %s315
          %321 = dma.vmem_to_hbm [thread:$0]  %s316, 1024, %s314, %s300, 256, 256, 16
        $region36: #{tpu_custom_call.1} parent=27 // pred_fallthru
          _
      $region28: #{tpu_custom_call.1} parent=5 // pred_fallthru
        _
      %p322 = scmp.le.s32.totalorder 2, %s14
      // Predicated region
      $region37: #{tpu_custom_call.1} parent=5 // pred_check
        %p323 = pneg %p322
      $region38: #{tpu_custom_call.1} parent=5 // pred_check_branch
        %325 = sbr.rel (%p323) target = $region40
      $region39: #{tpu_custom_call.1} parent=5 // pred_region
        %s326 = ssub.s32 %s14, 2
        // Predicated region
        $region41: #{tpu_custom_call.1} parent=39 // pred_check
          %p327 = pneg %p106
        $region42: #{tpu_custom_call.1} parent=39 // pred_check_branch
          %329 = sbr.rel (%p327) target = $region44
        $region43: #{tpu_custom_call.1} parent=39 // pred_region
          %s330 = sand.u32 %s91, 1
          %s331 = scalar_lea.sflag [#allocation4], %s330
          %s332 = sand.u32 %s91, 1
          %s333 = smul.addr %s332, 64
          %s334 = scalar_lea.vmem [#allocation5], %s333
          %335 = dma.done %s331, 1024
        $region44: #{tpu_custom_call.1} parent=39 // pred_fallthru
          _
      $region40: #{tpu_custom_call.1} parent=5 // pred_fallthru
        _
    $region6: #{tpu_custom_call.1} parent=1 // loop_footer
      %s18 = sadd.s32 1, %s14
    $region7: #{tpu_custom_call.1} parent=1 // loop_footer_branch
      %13 = sbr.rel target = $region3
    $region8: #{tpu_custom_call.1} parent=1 // loop_exit
      _
    %336 = vsyncpa [#allocation3], 1
    %s337 = scalar_lea.sflag [#allocation3], 1
    %338 = vsyncpa %s337, 1
    %339 = vsyncpa [#allocation4], 1
    %s340 = scalar_lea.sflag [#allocation4], 1
    %341 = vsyncpa %s340, 1

</llo_original>
